<compile_context>
chip_gen: v6e
topology: v6e:2x2x1
jax: 0.10.0
libtpu: 0.0.40
codegen_flags: <defaults>
</compile_context>

<pallas_src>
import functools
import math

import jax
import jax.numpy as jnp
from jax.experimental import pallas as pl
from jax.experimental.pallas import tpu as pltpu

LANE = 128


def _round_up(x, m):
    return ((x + m - 1) // m) * m


def _pad_to(a, shape):
    return jnp.pad(a, [(0, s - d) for d, s in zip(a.shape, shape)])


# -----------------------------------------------------------------------------
# Pallas kernel: full forward of the residual encoder net on one batch tile.
# -----------------------------------------------------------------------------
def _encoder_kernel(u_ref, y_ref, wAu_ref, wAy_ref, bA_ref,
                    w1_ref, b1_ref, w2_ref, b2_ref, out_ref, *, hp):
    # Fused first stage on the MXU:  [MLP layer 0 | residual linear]
    #   cat([u, y]) @ [w0 | w_lin]  ==  u @ wAu + y @ wAy      (no concat needed)
    t = (jnp.dot(u_ref[...], wAu_ref[...], preferred_element_type=jnp.float32)
         + jnp.dot(y_ref[...], wAy_ref[...], preferred_element_type=jnp.float32)
         + bA_ref[...])                                          # (TM, HP+NXP)

    h = jnp.tanh(t[:, :hp])                                      # MLP hidden (TM, HP)
    lin = t[:, hp:]                                              # residual path (TM, NXP)

    # Remaining MLP path: Linear -> tanh -> Linear (all padded to 128 lanes).
    h = jnp.tanh(jnp.dot(h, w1_ref[...], preferred_element_type=jnp.float32)
                 + b1_ref[...])
    nl = jnp.dot(h, w2_ref[...], preferred_element_type=jnp.float32) + b2_ref[...]

    out_ref[...] = (lin + nl).astype(out_ref.dtype)              # lane-dense store


# -----------------------------------------------------------------------------
# Wrapper: reshape / pad / fuse glue in plain JAX, hot path in the kernel.
# -----------------------------------------------------------------------------
def modified_encoder_net_forward(upast, ypast, params, *, tm=256):
    B = upast.shape[0]
    u = upast.reshape(B, -1).astype(jnp.float32)                 # (B, nb*prod(nu))
    y = ypast.reshape(B, -1).astype(jnp.float32)                 # (B, na*prod(ny))
    du, dy = u.shape[1], y.shape[1]
    # TODO(synk): assumes du > 0 and dy > 0 (true for the module: nb,na >= 1).

    wl, bl = params["w_lin"], params["b_lin"]
    w0, b0 = params["w0"], params["b0"]
    w1, b1 = params["w1"], params["b1"]
    w2, b2 = params["w2"], params["b2"]

    nx = wl.shape[1]
    H = w0.shape[1]

    # Lane-dense padded widths (zero padding keeps the math exact).
    HP = _round_up(H, LANE)
    NXP = _round_up(nx, LANE)

    # Fused + padded parameters; first-stage weight split along its input rows
    # so the kernel never needs a concatenated input.
    wA = jnp.concatenate(
        [_pad_to(w0.astype(jnp.float32), (du + dy, HP)),
         _pad_to(wl.astype(jnp.float32), (du + dy, NXP))], axis=1)
    wAu, wAy = wA[:du], wA[du:]
    bA = jnp.concatenate(
        [_pad_to(b0.reshape(1, -1).astype(jnp.float32), (1, HP)),
         _pad_to(bl.reshape(1, -1).astype(jnp.float32), (1, NXP))], axis=1)
    w1p = _pad_to(w1.astype(jnp.float32), (HP, HP))
    b1p = _pad_to(b1.reshape(1, -1).astype(jnp.float32), (1, HP))
    w2p = _pad_to(w2.astype(jnp.float32), (HP, NXP))
    b2p = _pad_to(b2.reshape(1, -1).astype(jnp.float32), (1, NXP))

    # Batch tiling: large tile, padded batch so any B works (no divisibility assert).
    tm = max(8, min(tm, _round_up(B, 8)))
    Bp = _round_up(B, tm)
    if Bp != B:
        u = jnp.pad(u, ((0, Bp - B), (0, 0)))
        y = jnp.pad(y, ((0, Bp - B), (0, 0)))
    grid = (Bp // tm,)

    def batch_spec(cols):
        return pl.BlockSpec((tm, cols), lambda i: (i, 0))

    def full_spec(shape):
        # Parameters: one full block, resident for every grid step (constant index_map).
        return pl.BlockSpec(shape, lambda i: (0, 0))

    out = pl.pallas_call(
        functools.partial(_encoder_kernel, hp=HP),
        out_shape=jax.ShapeDtypeStruct((Bp, NXP), jnp.float32),
        grid_spec=pltpu.PrefetchScalarGridSpec(
            num_scalar_prefetch=0,
            grid=grid,
            in_specs=[
                batch_spec(du),                # upast tile (TM, du)
                batch_spec(dy),                # ypast tile (TM, dy)
                full_spec((du, HP + NXP)),     # fused [w0 | w_lin], u rows
                full_spec((dy, HP + NXP)),     # fused [w0 | w_lin], y rows
                full_spec((1, HP + NXP)),      # fused [b0 | b_lin]
                full_spec((HP, HP)),           # w1 (padded)
                full_spec((1, HP)),            # b1 (padded)
                full_spec((HP, NXP)),          # w2 (padded)
                full_spec((1, NXP)),           # b2 (padded)
            ],
            out_specs=batch_spec(NXP),
        ),
        compiler_params=pltpu.CompilerParams(
            dimension_semantics=("parallel",)  # shard batch grid across TCs (v7x)
        ),
    )(u, y, wAu, wAy, bA, w1p, b1p, w2p, b2p)

    return out[:B, :nx]


# -----------------------------------------------------------------------------
# Deterministic parameter init (PyTorch nn.Linear-style uniform(-k, k)).
# -----------------------------------------------------------------------------
def init_params(key, n_in, nx, n_nodes):
    def linear(key, fan_in, fan_out):
        k = 1.0 / math.sqrt(fan_in)
        kw, kb = jax.random.split(key)
        w = jax.random.uniform(kw, (fan_in, fan_out), jnp.float32, -k, k)
        b = jax.random.uniform(kb, (1, fan_out), jnp.float32, -k, k)
        return w, b

    k_lin, k0, k1, k2 = jax.random.split(key, 4)
    w_lin, b_lin = linear(k_lin, n_in, nx)        # residual linear path
    w0, b0 = linear(k0, n_in, n_nodes)            # MLP layer 0
    w1, b1 = linear(k1, n_nodes, n_nodes)         # MLP layer 1
    w2, b2 = linear(k2, n_nodes, nx)              # MLP output layer
    return dict(w_lin=w_lin, b_lin=b_lin, w0=w0, b0=b0,
                w1=w1, b1=b1, w2=w2, b2=b2)


# Pure-JAX reference for a sanity check.
def _reference(upast, ypast, p):
    B = upast.shape[0]
    x = jnp.concatenate([upast.reshape(B, -1), ypast.reshape(B, -1)], axis=1)
    lin = x @ p["w_lin"] + p["b_lin"]
    h = jnp.tanh(x @ p["w0"] + p["b0"])
    h = jnp.tanh(h @ p["w1"] + p["b1"])
    return lin + (h @ p["w2"] + p["b2"])


if __name__ == "__main__":
    # Small shapes consistent with the module:
    #   nb=4 past inputs, nu=2 input channels, na=4 past outputs (ny forced to
    #   empty tuple by the module), nx=8 state dim, 64-node / 2-hidden MLP.
    # TODO(synk): kernel structure is fixed to n_hidden_layers=2 (the module default).
    nb, nu, na, nx = 4, 2, 4, 8
    n_nodes = 64
    B = 20                             # deliberately non-multiple of 8 to exercise padding
    n_in = nb * nu + na                # = 12

    key = jax.random.PRNGKey(0)
    k_u, k_y, k_p = jax.random.split(key, 3)
    upast = jax.random.normal(k_u, (B, nb, nu), jnp.float32)
    ypast = jax.random.normal(k_y, (B, na), jnp.float32)
    params = init_params(k_p, n_in, nx, n_nodes)

    out = modified_encoder_net_forward(upast, ypast, params)
    out = jax.block_until_ready(out)

    ref = _reference(upast, ypast, params)
    assert out.shape == (B, nx)
    assert jnp.allclose(out, ref, atol=1e-4, rtol=1e-4), "mismatch vs reference"

    print("KERNEL_OK")
</pallas_src>

<mosaic_0001>
module attributes {stable_mosaic.version = 11 : i64} {
  func.func @_encoder_kernel(%arg0: i32, %arg1: memref<24x8xf32, #tpu.memory_space<vmem>>, %arg2: memref<24x4xf32, #tpu.memory_space<vmem>>, %arg3: memref<8x256xf32, #tpu.memory_space<vmem>>, %arg4: memref<4x256xf32, #tpu.memory_space<vmem>>, %arg5: memref<1x256xf32, #tpu.memory_space<vmem>>, %arg6: memref<128x128xf32, #tpu.memory_space<vmem>>, %arg7: memref<1x128xf32, #tpu.memory_space<vmem>>, %arg8: memref<128x128xf32, #tpu.memory_space<vmem>>, %arg9: memref<1x128xf32, #tpu.memory_space<vmem>>, %arg10: memref<24x128xf32, #tpu.memory_space<vmem>>) attributes {dimension_semantics = [#tpu.dimension_semantics<parallel>], iteration_bounds = array<i64: 1>, scalar_prefetch = 0 : i64, scratch_operands = 0 : i64, tpu.core_type = #tpu.core_type<tc>, window_params = [{transform_indices = @transform_0, window_bounds = array<i64: 24, 8>}, {transform_indices = @transform_1, window_bounds = array<i64: 24, 4>}, {pipeline_mode = #tpu.pipeline_mode<synchronous>, transform_indices = @transform_2, window_bounds = array<i64: 8, 256>}, {pipeline_mode = #tpu.pipeline_mode<synchronous>, transform_indices = @transform_3, window_bounds = array<i64: 4, 256>}, {pipeline_mode = #tpu.pipeline_mode<synchronous>, transform_indices = @transform_4, window_bounds = array<i64: 1, 256>}, {pipeline_mode = #tpu.pipeline_mode<synchronous>, transform_indices = @transform_5, window_bounds = array<i64: 128, 128>}, {pipeline_mode = #tpu.pipeline_mode<synchronous>, transform_indices = @transform_6, window_bounds = array<i64: 1, 128>}, {pipeline_mode = #tpu.pipeline_mode<synchronous>, transform_indices = @transform_7, window_bounds = array<i64: 128, 128>}, {pipeline_mode = #tpu.pipeline_mode<synchronous>, transform_indices = @transform_8, window_bounds = array<i64: 1, 128>}, {transform_indices = @transform_9, window_bounds = array<i64: 24, 128>}]} {
    %c0 = arith.constant 0 : index
    %c0_0 = arith.constant 0 : index
    %0 = vector.load %arg1[%c0, %c0_0] : memref<24x8xf32, #tpu.memory_space<vmem>>, vector<24x8xf32>
    %c0_1 = arith.constant 0 : index
    %c0_2 = arith.constant 0 : index
    %1 = vector.load %arg3[%c0_1, %c0_2] : memref<8x256xf32, #tpu.memory_space<vmem>>, vector<8x256xf32>
    %cst = arith.constant dense<0.000000e+00> : vector<24x256xf32>
    %2 = tpu.matmul %0, %1, %cst {dimension_numbers = #tpu.dot_dimension_numbers<[1], [0], [0], [1], [0, 0, 1, 1], [], []>} : vector<24x8xf32>, vector<8x256xf32>, vector<24x256xf32> -> vector<24x256xf32>
    %c0_3 = arith.constant 0 : index
    %c0_4 = arith.constant 0 : index
    %3 = vector.load %arg2[%c0_3, %c0_4] : memref<24x4xf32, #tpu.memory_space<vmem>>, vector<24x4xf32>
    %c0_5 = arith.constant 0 : index
    %c0_6 = arith.constant 0 : index
    %4 = vector.load %arg4[%c0_5, %c0_6] : memref<4x256xf32, #tpu.memory_space<vmem>>, vector<4x256xf32>
    %cst_7 = arith.constant dense<0.000000e+00> : vector<24x256xf32>
    %5 = tpu.matmul %3, %4, %cst_7 {dimension_numbers = #tpu.dot_dimension_numbers<[1], [0], [0], [1], [0, 0, 1, 1], [], []>} : vector<24x4xf32>, vector<4x256xf32>, vector<24x256xf32> -> vector<24x256xf32>
    %6 = arith.addf %2, %5 : vector<24x256xf32>
    %c0_8 = arith.constant 0 : index
    %c0_9 = arith.constant 0 : index
    %7 = vector.load %arg5[%c0_8, %c0_9] : memref<1x256xf32, #tpu.memory_space<vmem>>, vector<1x256xf32>
    %8 = vector.broadcast %7 : vector<1x256xf32> to vector<24x256xf32>
    %9 = arith.addf %6, %8 : vector<24x256xf32>
    %10 = vector.extract_strided_slice %9 {offsets = [0, 0], sizes = [24, 128], strides = [1, 1]} : vector<24x256xf32> to vector<24x128xf32>
    %11 = math.tanh %10 : vector<24x128xf32>
    %12 = vector.extract_strided_slice %9 {offsets = [0, 128], sizes = [24, 128], strides = [1, 1]} : vector<24x256xf32> to vector<24x128xf32>
    %c0_10 = arith.constant 0 : index
    %c0_11 = arith.constant 0 : index
    %13 = vector.load %arg6[%c0_10, %c0_11] : memref<128x128xf32, #tpu.memory_space<vmem>>, vector<128x128xf32>
    %cst_12 = arith.constant dense<0.000000e+00> : vector<24x128xf32>
    %14 = tpu.matmul %11, %13, %cst_12 {dimension_numbers = #tpu.dot_dimension_numbers<[1], [0], [0], [1], [0, 0, 1, 1], [], []>} : vector<24x128xf32>, vector<128x128xf32>, vector<24x128xf32> -> vector<24x128xf32>
    %c0_13 = arith.constant 0 : index
    %c0_14 = arith.constant 0 : index
    %15 = vector.load %arg7[%c0_13, %c0_14] : memref<1x128xf32, #tpu.memory_space<vmem>>, vector<1x128xf32>
    %16 = vector.broadcast %15 : vector<1x128xf32> to vector<24x128xf32>
    %17 = arith.addf %14, %16 : vector<24x128xf32>
    %18 = math.tanh %17 : vector<24x128xf32>
    %c0_15 = arith.constant 0 : index
    %c0_16 = arith.constant 0 : index
    %19 = vector.load %arg8[%c0_15, %c0_16] : memref<128x128xf32, #tpu.memory_space<vmem>>, vector<128x128xf32>
    %cst_17 = arith.constant dense<0.000000e+00> : vector<24x128xf32>
    %20 = tpu.matmul %18, %19, %cst_17 {dimension_numbers = #tpu.dot_dimension_numbers<[1], [0], [0], [1], [0, 0, 1, 1], [], []>} : vector<24x128xf32>, vector<128x128xf32>, vector<24x128xf32> -> vector<24x128xf32>
    %c0_18 = arith.constant 0 : index
    %c0_19 = arith.constant 0 : index
    %21 = vector.load %arg9[%c0_18, %c0_19] : memref<1x128xf32, #tpu.memory_space<vmem>>, vector<1x128xf32>
    %22 = vector.broadcast %21 : vector<1x128xf32> to vector<24x128xf32>
    %23 = arith.addf %20, %22 : vector<24x128xf32>
    %24 = arith.addf %12, %23 : vector<24x128xf32>
    %c0_20 = arith.constant 0 : index
    %c0_21 = arith.constant 0 : index
    %25 = vector.load %arg10[%c0_20, %c0_21] : memref<24x128xf32, #tpu.memory_space<vmem>>, vector<24x128xf32>
    tpu.vector_store %arg10[%c0_20, %c0_21], %24 {strides = array<i32>} : memref<24x128xf32, #tpu.memory_space<vmem>>, vector<24x128xf32>,
    return
  }
  func.func @transform_0(%arg0: i32) -> (i32, i32) {
    %c0_i32 = arith.constant 0 : i32
    %c0_i32_0 = arith.constant 0 : i32
    return %arg0, %c0_i32 : i32, i32
  }
  func.func @transform_1(%arg0: i32) -> (i32, i32) {
    %c0_i32 = arith.constant 0 : i32
    %c0_i32_0 = arith.constant 0 : i32
    return %arg0, %c0_i32 : i32, i32
  }
  func.func @transform_2(%arg0: i32) -> (i32, i32) {
    %c0_i32 = arith.constant 0 : i32
    %c0_i32_0 = arith.constant 0 : i32
    %c0_i32_1 = arith.constant 0 : i32
    return %c0_i32, %c0_i32_0 : i32, i32
  }
  func.func @transform_3(%arg0: i32) -> (i32, i32) {
    %c0_i32 = arith.constant 0 : i32
    %c0_i32_0 = arith.constant 0 : i32
    %c0_i32_1 = arith.constant 0 : i32
    return %c0_i32, %c0_i32_0 : i32, i32
  }
  func.func @transform_4(%arg0: i32) -> (i32, i32) {
    %c0_i32 = arith.constant 0 : i32
    %c0_i32_0 = arith.constant 0 : i32
    %c0_i32_1 = arith.constant 0 : i32
    return %c0_i32, %c0_i32_0 : i32, i32
  }
  func.func @transform_5(%arg0: i32) -> (i32, i32) {
    %c0_i32 = arith.constant 0 : i32
    %c0_i32_0 = arith.constant 0 : i32
    %c0_i32_1 = arith.constant 0 : i32
    return %c0_i32, %c0_i32_0 : i32, i32
  }
  func.func @transform_6(%arg0: i32) -> (i32, i32) {
    %c0_i32 = arith.constant 0 : i32
    %c0_i32_0 = arith.constant 0 : i32
    %c0_i32_1 = arith.constant 0 : i32
    return %c0_i32, %c0_i32_0 : i32, i32
  }
  func.func @transform_7(%arg0: i32) -> (i32, i32) {
    %c0_i32 = arith.constant 0 : i32
    %c0_i32_0 = arith.constant 0 : i32
    %c0_i32_1 = arith.constant 0 : i32
    return %c0_i32, %c0_i32_0 : i32, i32
  }
  func.func @transform_8(%arg0: i32) -> (i32, i32) {
    %c0_i32 = arith.constant 0 : i32
    %c0_i32_0 = arith.constant 0 : i32
    %c0_i32_1 = arith.constant 0 : i32
    return %c0_i32, %c0_i32_0 : i32, i32
  }
  func.func @transform_9(%arg0: i32) -> (i32, i32) {
    %c0_i32 = arith.constant 0 : i32
    %c0_i32_0 = arith.constant 0 : i32
    return %arg0, %c0_i32 : i32, i32
  }
}

</mosaic_0001>

<llo_original>
// kernel: tpu_custom_call.1
$region0: #{tpu_custom_call.1}
  #allocation0 [shape = 'u32[]', space=smem, size = 0x4, offset = 0x4, fixed_abs, tag = 'smem constant byte address 0x4 - core index']
  #allocation1 [shape = 'u32[144,128]{1,0:T(1,128)}', space=vmem, size = 0x12000, scoped, tag = 'internal scratch']
  %s0 = inlined_call_operand.vmem [shape: f32[24,8], index: 0, kind: input, shape index: {}]
  %s1 = inlined_call_operand.vmem [shape: f32[24,4], index: 1, kind: input, shape index: {}]
  %s2 = inlined_call_operand.vmem [shape: f32[8,256], index: 2, kind: input, shape index: {}]
  %s3 = inlined_call_operand.vmem [shape: f32[4,256], index: 3, kind: input, shape index: {}]
  %s4 = inlined_call_operand.vmem [shape: f32[1,256], index: 4, kind: input, shape index: {}]
  %s5 = inlined_call_operand.hbm [shape: f32[128,128], index: 5, kind: input, shape index: {}]
  %s6 = inlined_call_operand.vmem [shape: f32[1,128], index: 6, kind: input, shape index: {}]
  %s7 = inlined_call_operand.hbm [shape: f32[128,128], index: 7, kind: input, shape index: {}]
  %s8 = inlined_call_operand.vmem [shape: f32[1,128], index: 8, kind: input, shape index: {}]
  %s9 = inlined_call_operand.hbm [shape: f32[24,128], index: 9, kind: output, shape index: {}]
  %s10 = sld [smem:[#allocation0]]
  $region54: #{tpu_custom_call.1} parent=0
    _
  %s12 = ssub.s32 1, %s10
  %s13 = scalar_select 0, %s12, %s10
  $region1: #{tpu_custom_call.1} parent=0
    #allocation2 [shape = 'u8[65536]{0}', space=vmem, size = 0x10000, scoped, tag = 'input window, operand 5, single buffered']
    #allocation3 [shape = 's32[1]{0}', space=sflag, size = 0x4, scoped, tag = 'scoped memory for tpu_custom_call.1']
    #allocation4 [shape = 's32[1]{0}', space=sflag, size = 0x4, scoped, tag = 'scoped memory for tpu_custom_call.1']
    #allocation5 [shape = 'u8[65536]{0}', space=vmem, size = 0x10000, scoped, tag = 'input window, operand 7, single buffered']
    #allocation6 [shape = 's32[1]{0}', space=sflag, size = 0x4, scoped, tag = 'scoped memory for tpu_custom_call.1']
    #allocation7 [shape = 'u8[12288]{0}', space=vmem, size = 0x3000, scoped, tag = 'output window, operand 0, single buffered']
    %14 = vsyncpa [#allocation3], 0
    %15 = vsyncpa [#allocation6], 0
    %16 = vsyncpa [#allocation4], 0
    // Predicated region
    $region2: #{tpu_custom_call.1} parent=1 // pred_check
      _
    $region3: #{tpu_custom_call.1} parent=1 // pred_check_branch
      %18 = sbr.rel (0) target = $region5
    $region4: #{tpu_custom_call.1} parent=1 // pred_region
      _
    $region5: #{tpu_custom_call.1} parent=1 // pred_fallthru
      _
    // Predicated region
    $region6: #{tpu_custom_call.1} parent=1 // pred_check
      _
    $region7: #{tpu_custom_call.1} parent=1 // pred_check_branch
      %20 = sbr.rel (0) target = $region9
    $region8: #{tpu_custom_call.1} parent=1 // pred_region
      _
    $region9: #{tpu_custom_call.1} parent=1 // pred_fallthru
      _
    // Predicated region
    $region10: #{tpu_custom_call.1} parent=1 // pred_check
      _
    $region11: #{tpu_custom_call.1} parent=1 // pred_check_branch
      %22 = sbr.rel (0) target = $region13
    $region12: #{tpu_custom_call.1} parent=1 // pred_region
      _
    $region13: #{tpu_custom_call.1} parent=1 // pred_fallthru
      _
    // Predicated region
    $region14: #{tpu_custom_call.1} parent=1 // pred_check
      _
    $region15: #{tpu_custom_call.1} parent=1 // pred_check_branch
      %24 = sbr.rel (0) target = $region17
    $region16: #{tpu_custom_call.1} parent=1 // pred_region
      _
    $region17: #{tpu_custom_call.1} parent=1 // pred_fallthru
      _
    // Predicated region
    $region18: #{tpu_custom_call.1} parent=1 // pred_check
      _
    $region19: #{tpu_custom_call.1} parent=1 // pred_check_branch
      %26 = sbr.rel (0) target = $region21
    $region20: #{tpu_custom_call.1} parent=1 // pred_region
      _
    $region21: #{tpu_custom_call.1} parent=1 // pred_fallthru
      _
    // Predicated region
    $region22: #{tpu_custom_call.1} parent=1 // pred_check
      _
    $region23: #{tpu_custom_call.1} parent=1 // pred_check_branch
      %28 = sbr.rel (0) target = $region25
    $region24: #{tpu_custom_call.1} parent=1 // pred_region
      %s30 = ssub.s32 2048, 2048
      %31 = vsyncadd [#allocation3], %s30
      %s32 = sshll.u32 [#allocation2], 4
      %s33 = int_to_ptr.vmem [resolvable:$true] %s32
      %38 = dma.hbm_to_vmem [thread:$0]  %s5, 2048, %s33, [#allocation3], 128, 128, 8
    $region25: #{tpu_custom_call.1} parent=1 // pred_fallthru
      _
    // Predicated region
    $region26: #{tpu_custom_call.1} parent=1 // pred_check
      _
    $region27: #{tpu_custom_call.1} parent=1 // pred_check_branch
      %40 = sbr.rel (0) target = $region29
    $region28: #{tpu_custom_call.1} parent=1 // pred_region
      _
    $region29: #{tpu_custom_call.1} parent=1 // pred_fallthru
      _
    // Predicated region
    $region30: #{tpu_custom_call.1} parent=1 // pred_check
      _
    $region31: #{tpu_custom_call.1} parent=1 // pred_check_branch
      %42 = sbr.rel (0) target = $region33
    $region32: #{tpu_custom_call.1} parent=1 // pred_region
      %s44 = ssub.s32 2048, 2048
      %45 = vsyncadd [#allocation6], %s44
      %s46 = sshll.u32 [#allocation5], 4
      %s47 = int_to_ptr.vmem [resolvable:$true] %s46
      %52 = dma.hbm_to_vmem [thread:$0]  %s7, 2048, %s47, [#allocation6], 128, 128, 8
    $region33: #{tpu_custom_call.1} parent=1 // pred_fallthru
      _
    // Predicated region
    $region34: #{tpu_custom_call.1} parent=1 // pred_check
      _
    $region35: #{tpu_custom_call.1} parent=1 // pred_check_branch
      %54 = sbr.rel (0) target = $region37
    $region36: #{tpu_custom_call.1} parent=1 // pred_region
      _
    $region37: #{tpu_custom_call.1} parent=1 // pred_fallthru
      _
    // Predicated region
    $region38: #{tpu_custom_call.1} parent=1 // pred_check
      _
    $region39: #{tpu_custom_call.1} parent=1 // pred_check_branch
      %56 = sbr.rel (0) target = $region41
    $region40: #{tpu_custom_call.1} parent=1 // pred_region
      %57 = dma.done [#allocation3], 2048
    $region41: #{tpu_custom_call.1} parent=1 // pred_fallthru
      _
    // Predicated region
    $region42: #{tpu_custom_call.1} parent=1 // pred_check
      _
    $region43: #{tpu_custom_call.1} parent=1 // pred_check_branch
      %59 = sbr.rel (0) target = $region45
    $region44: #{tpu_custom_call.1} parent=1 // pred_region
      %60 = dma.done [#allocation6], 2048
    $region45: #{tpu_custom_call.1} parent=1 // pred_fallthru
      _
    %v61 = vld [vmem:[%s0] sm:$0xff]
    %v62 = vld [vmem:[%s0 + $0x8] sm:$0xff]
    %v63 = vld [vmem:[%s0 + $0x10] sm:$0xff]
    %v64 = vld [vmem:[%s2] sm:$0xff]
    %v65 = vld [vmem:[%s2 + $0x8] sm:$0xff]
    %v66 = vld [vmem:[%s1] sm:$0xff]
    %v67 = vld [vmem:[%s1 + $0x8] sm:$0xff]
    %v68 = vld [vmem:[%s1 + $0x10] sm:$0xff]
    %v69 = vld [vmem:[%s3] sm:$0xff]
    %v71 = vcombine.high %v69, %v69
    %vm72 = vcmask 31744
    %v74 = vsel %vm72, %v66, 0
    %v77 = vsel %vm72, %v67, 0
    %v80 = vsel %vm72, %v68, 0
    %vm82 = vcmask 1043456
    %v83 = vsel %vm82, %v69, 0
    %v85 = vsel %vm82, %v71, 0
    %87 = vmatprep.subr.mxu0 0.0
    %88 = vmatpush1.msra.mxu0 0.0
    %89 = vmatprep.subr.mxu0 0.0
    %90 = vmatpush1.msra.mxu0 0.0
    %91 = vmatprep.subr.mxu0 0.0
    %92 = vmatpush1.msra.mxu0 0.0
    %93 = vmatprep.subr.mxu0 0.0
    %94 = vmatpush1.msra.mxu0 0.0
    %95 = vmatprep.subr.mxu0 0.0
    %96 = vmatpush1.msra.mxu0 0.0
    %97 = vmatprep.subr.mxu0 0.0
    %98 = vmatpush1.msra.mxu0 0.0
    %99 = vmatprep.subr.mxu0 0.0
    %100 = vmatpush1.msra.mxu0 0.0
    %101 = vmatprep.subr.mxu0 0.0
    %102 = vmatpush1.msra.mxu0 0.0
    %103 = vmatprep.subr.mxu0 0.0
    %104 = vmatpush1.msra.mxu0 0.0
    %105 = vmatprep.subr.mxu0 0.0
    %106 = vmatpush1.msra.mxu0 0.0
    %107 = vmatprep.subr.mxu0 0.0
    %108 = vmatpush1.msra.mxu0 0.0
    %109 = vmatprep.subr.mxu0 0.0
    %110 = vmatpush1.msra.mxu0 0.0
    %111 = vmatprep.subr.mxu0 0.0
    %112 = vmatpush1.msra.mxu0 0.0
    %113 = vmatprep.subr.mxu0 0.0
    %114 = vmatpush1.msra.mxu0 0.0
    %115 = vmatprep.subr.mxu0 0.0
    %116 = vmatpush1.msra.mxu0 0.0
    %117 = vmatprep.subr.mxu0 %v85
    %118 = vmatpush1.msra.mxu0 %v83
    %119 = vmatprep.subr.mxu0 0.0
    %120 = vmatpush2.msra.mxu0 0.0
    %121 = vmatprep.subr.mxu0 0.0
    %122 = vmatpush2.msra.mxu0 0.0
    %123 = vmatprep.subr.mxu0 0.0
    %124 = vmatpush2.msra.mxu0 0.0
    %125 = vmatprep.subr.mxu0 0.0
    %126 = vmatpush2.msra.mxu0 0.0
    %127 = vmatprep.subr.mxu0 0.0
    %128 = vmatpush2.msra.mxu0 0.0
    %129 = vmatprep.subr.mxu0 0.0
    %130 = vmatpush2.msra.mxu0 0.0
    %131 = vmatprep.subr.mxu0 0.0
    %132 = vmatpush2.msra.mxu0 0.0
    %133 = vmatprep.subr.mxu0 0.0
    %134 = vmatpush2.msra.mxu0 0.0
    %135 = vmatprep.subr.mxu0 0.0
    %136 = vmatpush2.msra.mxu0 0.0
    %137 = vmatprep.subr.mxu0 0.0
    %138 = vmatpush2.msra.mxu0 0.0
    %139 = vmatprep.subr.mxu0 0.0
    %140 = vmatpush2.msra.mxu0 0.0
    %141 = vmatprep.subr.mxu0 0.0
    %142 = vmatpush2.msra.mxu0 0.0
    %143 = vmatprep.subr.mxu0 0.0
    %144 = vmatpush2.msra.mxu0 0.0
    %145 = vmatprep.subr.mxu0 0.0
    %146 = vmatpush2.msra.mxu0 0.0
    %147 = vmatprep.subr.mxu0 0.0
    %148 = vmatpush2.msra.mxu0 0.0
    %149 = vmatprep.subr.mxu0 0.0
    %150 = vmatpush2.msra.mxu0 0.0
    %151 = vmatprep.mubr.f32.mxu0 0.0
    %152 = vmatmul.mubr.f32.gmra.mxu0 %v74
    %v153 = vpop.f32.mrf.mxu0
    %v154 = vadd.f32 0.0, %v153
    %v155 = vpop.f32.mrf.mxu0
    %v156 = vadd.f32 0.0, %v155
    %157 = vmatprep.mubr.f32.mxu0 0.0
    %158 = vmatmul.mubr.f32.gmra.mxu0 %v77
    %v159 = vpop.f32.mrf.mxu0
    %v160 = vadd.f32 0.0, %v159
    %v161 = vpop.f32.mrf.mxu0
    %v162 = vadd.f32 0.0, %v161
    %163 = vmatprep.mubr.f32.mxu0 0.0
    %164 = vmatmul.mubr.f32.gmra.mxu0 %v80
    %v165 = vpop.f32.mrf.mxu0
    %v166 = vadd.f32 0.0, %v165
    %v167 = vpop.f32.mrf.mxu0
    %v168 = vadd.f32 0.0, %v167
    %169 = vdwg.mxu0
    %vm170 = vcmask 64512
    %v172 = vsel %vm170, %v61, 0
    %v175 = vsel %vm170, %v62, 0
    %v178 = vsel %vm170, %v63, 0
    %180 = vmatprep.subr.mxu0 0.0
    %181 = vmatpush1.msra.mxu0 0.0
    %182 = vmatprep.subr.mxu0 0.0
    %183 = vmatpush1.msra.mxu0 0.0
    %184 = vmatprep.subr.mxu0 0.0
    %185 = vmatpush1.msra.mxu0 0.0
    %186 = vmatprep.subr.mxu0 0.0
    %187 = vmatpush1.msra.mxu0 0.0
    %188 = vmatprep.subr.mxu0 0.0
    %189 = vmatpush1.msra.mxu0 0.0
    %190 = vmatprep.subr.mxu0 0.0
    %191 = vmatpush1.msra.mxu0 0.0
    %192 = vmatprep.subr.mxu0 0.0
    %193 = vmatpush1.msra.mxu0 0.0
    %194 = vmatprep.subr.mxu0 0.0
    %195 = vmatpush1.msra.mxu0 0.0
    %196 = vmatprep.subr.mxu0 0.0
    %197 = vmatpush1.msra.mxu0 0.0
    %198 = vmatprep.subr.mxu0 0.0
    %199 = vmatpush1.msra.mxu0 0.0
    %200 = vmatprep.subr.mxu0 0.0
    %201 = vmatpush1.msra.mxu0 0.0
    %202 = vmatprep.subr.mxu0 0.0
    %203 = vmatpush1.msra.mxu0 0.0
    %204 = vmatprep.subr.mxu0 0.0
    %205 = vmatpush1.msra.mxu0 0.0
    %206 = vmatprep.subr.mxu0 0.0
    %207 = vmatpush1.msra.mxu0 0.0
    %208 = vmatprep.subr.mxu0 0.0
    %209 = vmatpush1.msra.mxu0 0.0
    %210 = vmatprep.subr.mxu0 %v65
    %211 = vmatpush1.msra.mxu0 %v64
    %212 = vmatprep.subr.mxu0 0.0
    %213 = vmatpush2.msra.mxu0 0.0
    %214 = vmatprep.subr.mxu0 0.0
    %215 = vmatpush2.msra.mxu0 0.0
    %216 = vmatprep.subr.mxu0 0.0
    %217 = vmatpush2.msra.mxu0 0.0
    %218 = vmatprep.subr.mxu0 0.0
    %219 = vmatpush2.msra.mxu0 0.0
    %220 = vmatprep.subr.mxu0 0.0
    %221 = vmatpush2.msra.mxu0 0.0
    %222 = vmatprep.subr.mxu0 0.0
    %223 = vmatpush2.msra.mxu0 0.0
    %224 = vmatprep.subr.mxu0 0.0
    %225 = vmatpush2.msra.mxu0 0.0
    %226 = vmatprep.subr.mxu0 0.0
    %227 = vmatpush2.msra.mxu0 0.0
    %228 = vmatprep.subr.mxu0 0.0
    %229 = vmatpush2.msra.mxu0 0.0
    %230 = vmatprep.subr.mxu0 0.0
    %231 = vmatpush2.msra.mxu0 0.0
    %232 = vmatprep.subr.mxu0 0.0
    %233 = vmatpush2.msra.mxu0 0.0
    %234 = vmatprep.subr.mxu0 0.0
    %235 = vmatpush2.msra.mxu0 0.0
    %236 = vmatprep.subr.mxu0 0.0
    %237 = vmatpush2.msra.mxu0 0.0
    %238 = vmatprep.subr.mxu0 0.0
    %239 = vmatpush2.msra.mxu0 0.0
    %240 = vmatprep.subr.mxu0 0.0
    %241 = vmatpush2.msra.mxu0 0.0
    %242 = vmatprep.subr.mxu0 0.0
    %243 = vmatpush2.msra.mxu0 0.0
    %244 = vmatprep.mubr.f32.mxu0 0.0
    %245 = vmatmul.mubr.f32.gmra.mxu0 %v172
    %v246 = vpop.f32.mrf.mxu0
    %v247 = vadd.f32 %v154, %v246
    %v248 = vpop.f32.mrf.mxu0
    %v249 = vadd.f32 %v156, %v248
    %250 = vmatprep.mubr.f32.mxu0 0.0
    %251 = vmatmul.mubr.f32.gmra.mxu0 %v175
    %v252 = vpop.f32.mrf.mxu0
    %v253 = vadd.f32 %v160, %v252
    %v254 = vpop.f32.mrf.mxu0
    %v255 = vadd.f32 %v162, %v254
    %256 = vmatprep.mubr.f32.mxu0 0.0
    %257 = vmatmul.mubr.f32.gmra.mxu0 %v178
    %v258 = vpop.f32.mrf.mxu0
    %v259 = vadd.f32 %v166, %v258
    %v260 = vpop.f32.mrf.mxu0
    %v261 = vadd.f32 %v168, %v260
    %262 = vdwg.mxu0
    %v263 = vld [vmem:[%s4] sm:$0x3]
    %v265 = vlaneseq
    %v266 = vshrl.u32 %v265, 7
    %v267 = vsub.s32 0, %v266
    %v268 = vrot.slane %v263, %v267
    %v269 = vlaneseq
    %v270 = vshrl.u32 %v269, 7
    %v271 = vsub.s32 1, %v270
    %v272 = vrot.slane %v263, %v271
    %v275 = vadd.f32 %v247, %v268
    %v276 = vadd.f32 %v249, %v272
    %v277 = vadd.f32 %v253, %v268
    %v278 = vadd.f32 %v255, %v272
    %v279 = vadd.f32 %v259, %v268
    %v280 = vadd.f32 %v261, %v272
    %v281 = vtanh.pop %v275
    %v282 = vtanh.pop %v277
    %v283 = vtanh.pop %v279
    %v284 = vld [vmem:[#allocation2] sm:$0xff]
    %v285 = vld [vmem:[#allocation2 + $0x8] sm:$0xff]
    %v286 = vld [vmem:[#allocation2 + $0x10] sm:$0xff]
    %v287 = vld [vmem:[#allocation2 + $0x18] sm:$0xff]
    %v288 = vld [vmem:[#allocation2 + $0x20] sm:$0xff]
    %v289 = vld [vmem:[#allocation2 + $0x28] sm:$0xff]
    %v290 = vld [vmem:[#allocation2 + $0x30] sm:$0xff]
    %v291 = vld [vmem:[#allocation2 + $0x38] sm:$0xff]
    %v292 = vld [vmem:[#allocation2 + $0x40] sm:$0xff]
    %v293 = vld [vmem:[#allocation2 + $0x48] sm:$0xff]
    %v294 = vld [vmem:[#allocation2 + $0x50] sm:$0xff]
    %v295 = vld [vmem:[#allocation2 + $0x58] sm:$0xff]
    %v296 = vld [vmem:[#allocation2 + $0x60] sm:$0xff]
    %v297 = vld [vmem:[#allocation2 + $0x68] sm:$0xff]
    %v298 = vld [vmem:[#allocation2 + $0x70] sm:$0xff]
    %v299 = vld [vmem:[#allocation2 + $0x78] sm:$0xff]
    %v300 = vld [vmem:[%s6] sm:$0x1]
    %v302 = vlaneseq
    %v303 = vshrl.u32 %v302, 7
    %v304 = vsub.s32 0, %v303
    %v305 = vrot.slane %v300, %v304
    %307 = vmatprep.subr.mxu0 0.0
    %308 = vmatpush1.msra.mxu0 %v299
    %309 = vmatprep.subr.mxu0 0.0
    %310 = vmatpush1.msra.mxu0 %v298
    %311 = vmatprep.subr.mxu0 0.0
    %312 = vmatpush1.msra.mxu0 %v297
    %313 = vmatprep.subr.mxu0 0.0
    %314 = vmatpush1.msra.mxu0 %v296
    %315 = vmatprep.subr.mxu0 0.0
    %316 = vmatpush1.msra.mxu0 %v295
    %317 = vmatprep.subr.mxu0 0.0
    %318 = vmatpush1.msra.mxu0 %v294
    %319 = vmatprep.subr.mxu0 0.0
    %320 = vmatpush1.msra.mxu0 %v293
    %321 = vmatprep.subr.mxu0 0.0
    %322 = vmatpush1.msra.mxu0 %v292
    %323 = vmatprep.subr.mxu0 0.0
    %324 = vmatpush1.msra.mxu0 %v291
    %325 = vmatprep.subr.mxu0 0.0
    %326 = vmatpush1.msra.mxu0 %v290
    %327 = vmatprep.subr.mxu0 0.0
    %328 = vmatpush1.msra.mxu0 %v289
    %329 = vmatprep.subr.mxu0 0.0
    %330 = vmatpush1.msra.mxu0 %v288
    %331 = vmatprep.subr.mxu0 0.0
    %332 = vmatpush1.msra.mxu0 %v287
    %333 = vmatprep.subr.mxu0 0.0
    %334 = vmatpush1.msra.mxu0 %v286
    %335 = vmatprep.subr.mxu0 0.0
    %336 = vmatpush1.msra.mxu0 %v285
    %337 = vmatprep.subr.mxu0 0.0
    %338 = vmatpush1.msra.mxu0 %v284
    %339 = vmatprep.subr.mxu0 0.0
    %340 = vmatpush2.msra.mxu0 0.0
    %341 = vmatprep.subr.mxu0 0.0
    %342 = vmatpush2.msra.mxu0 0.0
    %343 = vmatprep.subr.mxu0 0.0
    %344 = vmatpush2.msra.mxu0 0.0
    %345 = vmatprep.subr.mxu0 0.0
    %346 = vmatpush2.msra.mxu0 0.0
    %347 = vmatprep.subr.mxu0 0.0
    %348 = vmatpush2.msra.mxu0 0.0
    %349 = vmatprep.subr.mxu0 0.0
    %350 = vmatpush2.msra.mxu0 0.0
    %351 = vmatprep.subr.mxu0 0.0
    %352 = vmatpush2.msra.mxu0 0.0
    %353 = vmatprep.subr.mxu0 0.0
    %354 = vmatpush2.msra.mxu0 0.0
    %355 = vmatprep.subr.mxu0 0.0
    %356 = vmatpush2.msra.mxu0 0.0
    %357 = vmatprep.subr.mxu0 0.0
    %358 = vmatpush2.msra.mxu0 0.0
    %359 = vmatprep.subr.mxu0 0.0
    %360 = vmatpush2.msra.mxu0 0.0
    %361 = vmatprep.subr.mxu0 0.0
    %362 = vmatpush2.msra.mxu0 0.0
    %363 = vmatprep.subr.mxu0 0.0
    %364 = vmatpush2.msra.mxu0 0.0
    %365 = vmatprep.subr.mxu0 0.0
    %366 = vmatpush2.msra.mxu0 0.0
    %367 = vmatprep.subr.mxu0 0.0
    %368 = vmatpush2.msra.mxu0 0.0
    %369 = vmatprep.subr.mxu0 0.0
    %370 = vmatpush2.msra.mxu0 0.0
    %371 = vmatprep.mubr.f32.mxu0 0.0
    %372 = vmatmul.mubr.f32.gmra.mxu0 %v281
    %v373 = vpop.f32.mrf.mxu0
    %v374 = vadd.f32 %v305, %v373
    %v375 = vpop.f32.mrf.mxu0
    %376 = vmatprep.mubr.f32.mxu0 0.0
    %377 = vmatmul.mubr.f32.gmra.mxu0 %v282
    %v378 = vpop.f32.mrf.mxu0
    %v379 = vadd.f32 %v305, %v378
    %v380 = vpop.f32.mrf.mxu0
    %381 = vmatprep.mubr.f32.mxu0 0.0
    %382 = vmatmul.mubr.f32.gmra.mxu0 %v283
    %v383 = vpop.f32.mrf.mxu0
    %v384 = vadd.f32 %v305, %v383
    %v385 = vpop.f32.mrf.mxu0
    %386 = vdwg.mxu0
    %v387 = vtanh.pop %v374
    %v388 = vtanh.pop %v379
    %v389 = vtanh.pop %v384
    %v390 = vld [vmem:[#allocation5] sm:$0xff]
    %v391 = vld [vmem:[#allocation5 + $0x8] sm:$0xff]
    %v392 = vld [vmem:[#allocation5 + $0x10] sm:$0xff]
    %v393 = vld [vmem:[#allocation5 + $0x18] sm:$0xff]
    %v394 = vld [vmem:[#allocation5 + $0x20] sm:$0xff]
    %v395 = vld [vmem:[#allocation5 + $0x28] sm:$0xff]
    %v396 = vld [vmem:[#allocation5 + $0x30] sm:$0xff]
    %v397 = vld [vmem:[#allocation5 + $0x38] sm:$0xff]
    %v398 = vld [vmem:[#allocation5 + $0x40] sm:$0xff]
    %v399 = vld [vmem:[#allocation5 + $0x48] sm:$0xff]
    %v400 = vld [vmem:[#allocation5 + $0x50] sm:$0xff]
    %v401 = vld [vmem:[#allocation5 + $0x58] sm:$0xff]
    %v402 = vld [vmem:[#allocation5 + $0x60] sm:$0xff]
    %v403 = vld [vmem:[#allocation5 + $0x68] sm:$0xff]
    %v404 = vld [vmem:[#allocation5 + $0x70] sm:$0xff]
    %v405 = vld [vmem:[#allocation5 + $0x78] sm:$0xff]
    %v406 = vld [vmem:[%s8] sm:$0x1]
    %v408 = vlaneseq
    %v409 = vshrl.u32 %v408, 7
    %v410 = vsub.s32 0, %v409
    %v411 = vrot.slane %v406, %v410
    %413 = vmatprep.subr.mxu0 0.0
    %414 = vmatpush1.msra.mxu0 %v405
    %415 = vmatprep.subr.mxu0 0.0
    %416 = vmatpush1.msra.mxu0 %v404
    %417 = vmatprep.subr.mxu0 0.0
    %418 = vmatpush1.msra.mxu0 %v403
    %419 = vmatprep.subr.mxu0 0.0
    %420 = vmatpush1.msra.mxu0 %v402
    %421 = vmatprep.subr.mxu0 0.0
    %422 = vmatpush1.msra.mxu0 %v401
    %423 = vmatprep.subr.mxu0 0.0
    %424 = vmatpush1.msra.mxu0 %v400
    %425 = vmatprep.subr.mxu0 0.0
    %426 = vmatpush1.msra.mxu0 %v399
    %427 = vmatprep.subr.mxu0 0.0
    %428 = vmatpush1.msra.mxu0 %v398
    %429 = vmatprep.subr.mxu0 0.0
    %430 = vmatpush1.msra.mxu0 %v397
    %431 = vmatprep.subr.mxu0 0.0
    %432 = vmatpush1.msra.mxu0 %v396
    %433 = vmatprep.subr.mxu0 0.0
    %434 = vmatpush1.msra.mxu0 %v395
    %435 = vmatprep.subr.mxu0 0.0
    %436 = vmatpush1.msra.mxu0 %v394
    %437 = vmatprep.subr.mxu0 0.0
    %438 = vmatpush1.msra.mxu0 %v393
    %439 = vmatprep.subr.mxu0 0.0
    %440 = vmatpush1.msra.mxu0 %v392
    %441 = vmatprep.subr.mxu0 0.0
    %442 = vmatpush1.msra.mxu0 %v391
    %443 = vmatprep.subr.mxu0 0.0
    %444 = vmatpush1.msra.mxu0 %v390
    %445 = vmatprep.subr.mxu0 0.0
    %446 = vmatpush2.msra.mxu0 0.0
    %447 = vmatprep.subr.mxu0 0.0
    %448 = vmatpush2.msra.mxu0 0.0
    %449 = vmatprep.subr.mxu0 0.0
    %450 = vmatpush2.msra.mxu0 0.0
    %451 = vmatprep.subr.mxu0 0.0
    %452 = vmatpush2.msra.mxu0 0.0
    %453 = vmatprep.subr.mxu0 0.0
    %454 = vmatpush2.msra.mxu0 0.0
    %455 = vmatprep.subr.mxu0 0.0
    %456 = vmatpush2.msra.mxu0 0.0
    %457 = vmatprep.subr.mxu0 0.0
    %458 = vmatpush2.msra.mxu0 0.0
    %459 = vmatprep.subr.mxu0 0.0
    %460 = vmatpush2.msra.mxu0 0.0
    %461 = vmatprep.subr.mxu0 0.0
    %462 = vmatpush2.msra.mxu0 0.0
    %463 = vmatprep.subr.mxu0 0.0
    %464 = vmatpush2.msra.mxu0 0.0
    %465 = vmatprep.subr.mxu0 0.0
    %466 = vmatpush2.msra.mxu0 0.0
    %467 = vmatprep.subr.mxu0 0.0
    %468 = vmatpush2.msra.mxu0 0.0
    %469 = vmatprep.subr.mxu0 0.0
    %470 = vmatpush2.msra.mxu0 0.0
    %471 = vmatprep.subr.mxu0 0.0
    %472 = vmatpush2.msra.mxu0 0.0
    %473 = vmatprep.subr.mxu0 0.0
    %474 = vmatpush2.msra.mxu0 0.0
    %475 = vmatprep.subr.mxu0 0.0
    %476 = vmatpush2.msra.mxu0 0.0
    %477 = vmatprep.mubr.f32.mxu0 0.0
    %478 = vmatmul.mubr.f32.gmra.mxu0 %v387
    %v479 = vpop.f32.mrf.mxu0
    %v480 = vadd.f32 %v411, %v479
    %v481 = vpop.f32.mrf.mxu0
    %482 = vmatprep.mubr.f32.mxu0 0.0
    %483 = vmatmul.mubr.f32.gmra.mxu0 %v388
    %v484 = vpop.f32.mrf.mxu0
    %v485 = vadd.f32 %v411, %v484
    %v486 = vpop.f32.mrf.mxu0
    %487 = vmatprep.mubr.f32.mxu0 0.0
    %488 = vmatmul.mubr.f32.gmra.mxu0 %v389
    %v489 = vpop.f32.mrf.mxu0
    %v490 = vadd.f32 %v411, %v489
    %v491 = vpop.f32.mrf.mxu0
    %492 = vdwg.mxu0
    %v493 = vadd.f32 %v276, %v480
    %v494 = vadd.f32 %v278, %v485
    %v495 = vadd.f32 %v280, %v490
    %496 = vst [vmem:[#allocation7] sm:$0xff] %v493
    %497 = vst [vmem:[#allocation7 + $0x8] sm:$0xff] %v494
    %498 = vst [vmem:[#allocation7 + $0x10] sm:$0xff] %v495
    // Predicated region
    $region46: #{tpu_custom_call.1} parent=1 // pred_check
      _
    $region47: #{tpu_custom_call.1} parent=1 // pred_check_branch
      %500 = sbr.rel (0) target = $region49
    $region48: #{tpu_custom_call.1} parent=1 // pred_region
      %s502 = ssub.s32 384, 384
      %503 = vsyncadd [#allocation4], %s502
      %s504 = sshll.u32 [#allocation7], 4
      %s505 = int_to_ptr.vmem [resolvable:$true] %s504
      %510 = dma.vmem_to_hbm [thread:$0]  %s505, 384, %s9, [#allocation4], 128, 128, 8
    $region49: #{tpu_custom_call.1} parent=1 // pred_fallthru
      _
    // Predicated region
    $region50: #{tpu_custom_call.1} parent=1 // pred_check
      _
    $region51: #{tpu_custom_call.1} parent=1 // pred_check_branch
      %512 = sbr.rel (0) target = $region53
    $region52: #{tpu_custom_call.1} parent=1 // pred_region
      %513 = dma.done [#allocation4], 384
    $region53: #{tpu_custom_call.1} parent=1 // pred_fallthru
      _
    %514 = vsyncpa [#allocation3], 1
    %515 = vsyncpa [#allocation6], 1
    %516 = vsyncpa [#allocation4], 1

</llo_original>
